<compile_context>
chip_gen: v5e
topology: v5e:2x2
jax: 0.10.0
libtpu: 0.0.40
codegen_flags: <defaults>
</compile_context>

<pallas_src>
import math
import functools

import jax
import jax.numpy as jnp
from jax.experimental import pallas as pl
from jax.experimental.pallas import tpu as pltpu


def mha_kernel(x_ref, wqkv_ref, bqkv_ref, wo_ref, bo_ref, bias_ref, o_ref, *,
               nums_head, head_dim):
    B, S, H = x_ref.shape          # B here is the per-step batch block
    NH, hd = nums_head, head_dim
    BH = B * NH
    scale = 1.0 / math.sqrt(hd)

    # --- Build the collapsed (B*NH, ...) leading-batch layout (leading-dim ops only). ---
    x = x_ref[...]                                                         # (B, S, H) bf16
    xh = jnp.broadcast_to(x[:, None], (B, NH, S, H)).reshape(BH, S, H)     # replicate over heads

    wqkv = jnp.broadcast_to(wqkv_ref[...][None],
                            (B, NH, H, 3 * hd)).reshape(BH, H, 3 * hd)     # bf16
    bqkv = jnp.broadcast_to(bqkv_ref[...][None],
                            (B, NH, 1, 3 * hd)).reshape(BH, 1, 3 * hd)     # f32

    # --- Fused per-(batch, head) QKV projection: one batched MXU matmul, f32 accumulate. ---
    qkv = jnp.einsum('xsk,xkd->xsd', xh, wqkv,
                     preferred_element_type=jnp.float32) + bqkv            # (BH, S, 3*hd)

    q = (qkv[:, :, :hd] * scale).astype(jnp.bfloat16)   # scale folded into Q (covers bias too)
    k = qkv[:, :, hd:2 * hd].astype(jnp.bfloat16)
    v = qkv[:, :, 2 * hd:].astype(jnp.bfloat16)

    # --- Scores + additive mask bias (bias shared across heads; bf16 -> f32 promote on add). ---
    scores = jnp.einsum('xqd,xkd->xqk', q, k,
                        preferred_element_type=jnp.float32)                # (BH, S, S) f32
    bias = jnp.broadcast_to(bias_ref[...][:, None], (B, NH, S, S)).reshape(BH, S, S)
    scores = scores + bias                                                 # 0 / -1e20 additive

    # --- Softmax over keys (dim=3 in the PyTorch code); reciprocal on the EUP slot. ---
    m = jnp.max(scores, axis=-1, keepdims=True)
    p = jnp.exp(scores - m)
    l = jnp.sum(p, axis=-1, keepdims=True)
    p = (p * pl.reciprocal(l, approx=True)).astype(jnp.bfloat16)
    # TODO(synk): nn.Dropout(0.1) on attention weights omitted (eval/inference semantics).

    ctx = jnp.einsum('xqk,xkd->xqd', p, v,
                     preferred_element_type=jnp.float32).astype(jnp.bfloat16)   # (BH, S, hd)

    # --- Output projection folded over heads: out = sum_h ctx_h @ Wo_h (+ bo). ---
    wo = jnp.broadcast_to(wo_ref[...][None], (B, NH, hd, H)).reshape(BH, hd, H)
    proj = jnp.einsum('xqd,xdo->xqo', ctx, wo,
                      preferred_element_type=jnp.float32)                  # (BH, S, H)
    out = jnp.sum(proj.reshape(B, NH, S, H), axis=1) + bo_ref[...]         # (B, S, H) f32
    o_ref[...] = out.astype(o_ref.dtype)


def multi_head_attention(x, params, mask, nums_head, *, batch_block=None):
    B, S, H = x.shape
    hd = H // nums_head
    if batch_block is None:
        batch_block = B            # single grid step (best on single-TC v5e/v6e);
    assert B % batch_block == 0    # set batch_block = B // 2 on v7x for 2-way megacore.

    # --- Parameter layout prep (free XLA work outside the kernel). ---
    def split_w(w):                # (H, H) -> (NH, H, hd): per-head output-column blocks
        return w.reshape(H, nums_head, hd).transpose(1, 0, 2)

    def split_b(b):                # (1, H) -> (NH, 1, hd)
        return b.reshape(1, nums_head, hd)[0][:, None, :]

    wqkv_h = jnp.concatenate([split_w(params["wq"]), split_w(params["wk"]),
                              split_w(params["wv"])], axis=-1).astype(jnp.bfloat16)  # (NH,H,3hd)
    bqkv_h = jnp.concatenate([split_b(params["bq"]), split_b(params["bk"]),
                              split_b(params["bv"])], axis=-1).astype(jnp.float32)   # (NH,1,3hd)
    wo_h = params["wo"].reshape(nums_head, hd, H).astype(jnp.bfloat16)                # (NH,hd,H)
    bo = params["bo"].astype(jnp.float32)                                             # (1, H)

    # (B, [NH,] S, S) 0/1 mask -> (B, S, S) bf16 additive bias shared across heads.
    # NOTE: assumes the mask is identical across heads (true for this module's usage).
    mask_b = mask[:, 0] if mask.ndim == 4 else mask
    bias = jnp.where(mask_b == 0, jnp.float32(-1e20), jnp.float32(0.0)).astype(jnp.bfloat16)

    x_bf = x.astype(jnp.bfloat16)

    kernel = functools.partial(mha_kernel, nums_head=nums_head, head_dim=hd)
    grid = (B // batch_block,)

    return pl.pallas_call(
        kernel,
        out_shape=jax.ShapeDtypeStruct((B, S, H), x.dtype),
        grid=grid,
        in_specs=[
            pl.BlockSpec((batch_block, S, H), lambda i: (i, 0, 0)),        # X
            pl.BlockSpec((nums_head, H, 3 * hd), lambda i: (0, 0, 0)),     # fused head-split Wqkv
            pl.BlockSpec((nums_head, 1, 3 * hd), lambda i: (0, 0, 0)),     # fused head-split bqkv
            pl.BlockSpec((nums_head, hd, H), lambda i: (0, 0, 0)),         # Wo split per head
            pl.BlockSpec((1, H), lambda i: (0, 0)),                        # bo
            pl.BlockSpec((batch_block, S, S), lambda i: (i, 0, 0)),        # additive mask bias
        ],
        out_specs=pl.BlockSpec((batch_block, S, H), lambda i: (i, 0, 0)),
        compiler_params=pltpu.CompilerParams(dimension_semantics=("parallel",)),
    )(x_bf, wqkv_h, bqkv_h, wo_h, bo, bias)


def reference_mha(x, params, mask, nums_head):
    """Pure-JAX f32 reference matching the PyTorch forward (dropout in eval mode)."""
    B, S, H = x.shape
    hd = H // nums_head
    q = x @ params["wq"] + params["bq"][0]
    k = x @ params["wk"] + params["bk"][0]
    v = x @ params["wv"] + params["bv"][0]
    qs = q.reshape(B, S, nums_head, hd).transpose(0, 2, 1, 3)
    ks = k.reshape(B, S, nums_head, hd).transpose(0, 2, 1, 3)
    vs = v.reshape(B, S, nums_head, hd).transpose(0, 2, 1, 3)
    aw = jnp.einsum("bhqd,bhkd->bhqk", qs, ks) / math.sqrt(hd)
    aw = jnp.where(mask == 0, jnp.float32(-1e20), aw)
    aw = jax.nn.softmax(aw, axis=3)
    ctx = jnp.einsum("bhqk,bhkd->bhqd", aw, vs)
    ctx = ctx.transpose(0, 2, 1, 3).reshape(B, S, H)
    return ctx @ params["wo"] + params["bo"][0]


if __name__ == "__main__":
    B, S, H, NH = 2, 8, 32, 4  # batch, seq, hidden, heads (head_dim = 8)

    key = jax.random.PRNGKey(0)
    ks = jax.random.split(key, 10)

    x = jax.random.normal(ks[0], (B, S, H), dtype=jnp.float32)

    # Deterministic synthetic parameters (nn.Linear(hidden, hidden) x4, with bias).
    init = lambda k, shape: (jax.random.normal(k, shape, dtype=jnp.float32) * 0.05)
    params = {
        "wq": init(ks[1], (H, H)), "bq": init(ks[2], (1, H)),
        "wk": init(ks[3], (H, H)), "bk": init(ks[4], (1, H)),
        "wv": init(ks[5], (H, H)), "bv": init(ks[6], (1, H)),
        "wo": init(ks[7], (H, H)), "bo": init(ks[8], (1, H)),
    }

    # Binary attention mask (0 = masked), expanded over heads like the original script.
    mask01 = (jax.random.uniform(ks[9], (B, 1, S, S)) > 0.3).astype(jnp.int32)
    mask = jnp.asarray(jnp.broadcast_to(mask01, (B, NH, S, S)))

    out = multi_head_attention(x, params, mask, NH)
    out = jax.block_until_ready(out)

    ref = reference_mha(x, params, mask, NH)
    assert out.shape == (B, S, H)
    # bf16 matmul inputs (f32 accumulate) + approx reciprocal vs. f32 reference -> relaxed tol.
    err = jnp.max(jnp.abs(out - ref))
    assert jnp.allclose(out, ref, atol=2e-2, rtol=2e-2), f"mismatch vs reference, max |err|={err}"

    print("KERNEL_OK")
</pallas_src>

<mosaic_0001>
module attributes {stable_mosaic.version = 11 : i64} {
  func.func @mha_kernel(%arg0: i32, %arg1: memref<2x8x32xbf16, #tpu.memory_space<vmem>>, %arg2: memref<4x32x24xbf16, #tpu.memory_space<vmem>>, %arg3: memref<4x1x24xf32, #tpu.memory_space<vmem>>, %arg4: memref<4x8x32xbf16, #tpu.memory_space<vmem>>, %arg5: memref<1x32xf32, #tpu.memory_space<vmem>>, %arg6: memref<2x8x8xbf16, #tpu.memory_space<vmem>>, %arg7: memref<2x8x32xf32, #tpu.memory_space<vmem>>) attributes {dimension_semantics = [#tpu.dimension_semantics<parallel>], iteration_bounds = array<i64: 1>, scalar_prefetch = 0 : i64, scratch_operands = 0 : i64, tpu.core_type = #tpu.core_type<tc>, window_params = [{transform_indices = @transform_0, window_bounds = array<i64: 2, 8, 32>}, {pipeline_mode = #tpu.pipeline_mode<synchronous>, transform_indices = @transform_1, window_bounds = array<i64: 4, 32, 24>}, {pipeline_mode = #tpu.pipeline_mode<synchronous>, transform_indices = @transform_2, window_bounds = array<i64: 4, 1, 24>}, {pipeline_mode = #tpu.pipeline_mode<synchronous>, transform_indices = @transform_3, window_bounds = array<i64: 4, 8, 32>}, {pipeline_mode = #tpu.pipeline_mode<synchronous>, transform_indices = @transform_4, window_bounds = array<i64: 1, 32>}, {transform_indices = @transform_5, window_bounds = array<i64: 2, 8, 8>}, {transform_indices = @transform_6, window_bounds = array<i64: 2, 8, 32>}]} {
    %c0 = arith.constant 0 : index
    %c0_0 = arith.constant 0 : index
    %c0_1 = arith.constant 0 : index
    %0 = vector.load %arg1[%c0, %c0_0, %c0_1] : memref<2x8x32xbf16, #tpu.memory_space<vmem>>, vector<2x8x32xbf16>
    %1 = vector.shape_cast %0 : vector<2x8x32xbf16> to vector<2x1x8x32xbf16>
    %2 = vector.shape_cast %1 : vector<2x1x8x32xbf16> to vector<2x1x8x32xbf16>
    %3 = vector.broadcast %2 : vector<2x1x8x32xbf16> to vector<2x4x8x32xbf16>
    %4 = vector.shape_cast %3 : vector<2x4x8x32xbf16> to vector<8x8x32xbf16>
    %c0_2 = arith.constant 0 : index
    %c0_3 = arith.constant 0 : index
    %c0_4 = arith.constant 0 : index
    %5 = vector.load %arg2[%c0_2, %c0_3, %c0_4] : memref<4x32x24xbf16, #tpu.memory_space<vmem>>, vector<4x32x24xbf16>
    %6 = vector.shape_cast %5 : vector<4x32x24xbf16> to vector<1x4x32x24xbf16>
    %7 = vector.shape_cast %6 : vector<1x4x32x24xbf16> to vector<1x4x32x24xbf16>
    %8 = vector.broadcast %7 : vector<1x4x32x24xbf16> to vector<2x4x32x24xbf16>
    %9 = vector.shape_cast %8 : vector<2x4x32x24xbf16> to vector<8x32x24xbf16>
    %c0_5 = arith.constant 0 : index
    %c0_6 = arith.constant 0 : index
    %c0_7 = arith.constant 0 : index
    %10 = vector.load %arg3[%c0_5, %c0_6, %c0_7] : memref<4x1x24xf32, #tpu.memory_space<vmem>>, vector<4x1x24xf32>
    %11 = vector.shape_cast %10 : vector<4x1x24xf32> to vector<1x4x1x24xf32>
    %12 = vector.shape_cast %11 : vector<1x4x1x24xf32> to vector<1x4x1x24xf32>
    %13 = vector.broadcast %12 : vector<1x4x1x24xf32> to vector<2x4x1x24xf32>
    %14 = vector.shape_cast %13 : vector<2x4x1x24xf32> to vector<8x1x24xf32>
    "tpu.trace_start"() <{level = 10 : i32, message = "xsk,xkd->xsd"}> : () -> ()
    %cst = arith.constant dense<0.000000e+00> : vector<8x8x24xf32>
    %15 = tpu.matmul %4, %9, %cst {dimension_numbers = #tpu.dot_dimension_numbers<[2], [1], [1], [2], [0, 0, 0, 1, 1, 2], [0], [0]>} : vector<8x8x32xbf16>, vector<8x32x24xbf16>, vector<8x8x24xf32> -> vector<8x8x24xf32>
    "tpu.trace_stop"() : () -> ()
    %16 = vector.broadcast %14 : vector<8x1x24xf32> to vector<8x8x24xf32>
    %17 = arith.addf %15, %16 : vector<8x8x24xf32>
    %18 = vector.extract_strided_slice %17 {offsets = [0, 0, 0], sizes = [8, 8, 8], strides = [1, 1, 1]} : vector<8x8x24xf32> to vector<8x8x8xf32>
    %cst_8 = arith.constant 0.353553385 : f32
    %19 = vector.broadcast %cst_8 : f32 to vector<8x8x8xf32>
    %20 = arith.mulf %18, %19 : vector<8x8x8xf32>
    %21 = arith.truncf %20 : vector<8x8x8xf32> to vector<8x8x8xbf16>
    %22 = vector.extract_strided_slice %17 {offsets = [0, 0, 8], sizes = [8, 8, 8], strides = [1, 1, 1]} : vector<8x8x24xf32> to vector<8x8x8xf32>
    %23 = arith.truncf %22 : vector<8x8x8xf32> to vector<8x8x8xbf16>
    %24 = vector.extract_strided_slice %17 {offsets = [0, 0, 16], sizes = [8, 8, 8], strides = [1, 1, 1]} : vector<8x8x24xf32> to vector<8x8x8xf32>
    %25 = arith.truncf %24 : vector<8x8x8xf32> to vector<8x8x8xbf16>
    "tpu.trace_start"() <{level = 10 : i32, message = "xqd,xkd->xqk"}> : () -> ()
    %cst_9 = arith.constant dense<0.000000e+00> : vector<8x8x8xf32>
    %26 = tpu.matmul %21, %23, %cst_9 {dimension_numbers = #tpu.dot_dimension_numbers<[2], [2], [1], [1], [0, 0, 0, 1, 1, 1], [0], [0]>} : vector<8x8x8xbf16>, vector<8x8x8xbf16>, vector<8x8x8xf32> -> vector<8x8x8xf32>
    "tpu.trace_stop"() : () -> ()
    %c0_10 = arith.constant 0 : index
    %c0_11 = arith.constant 0 : index
    %c0_12 = arith.constant 0 : index
    %27 = vector.load %arg6[%c0_10, %c0_11, %c0_12] : memref<2x8x8xbf16, #tpu.memory_space<vmem>>, vector<2x8x8xbf16>
    %28 = vector.shape_cast %27 : vector<2x8x8xbf16> to vector<2x1x8x8xbf16>
    %29 = vector.shape_cast %28 : vector<2x1x8x8xbf16> to vector<2x1x8x8xbf16>
    %30 = vector.broadcast %29 : vector<2x1x8x8xbf16> to vector<2x4x8x8xbf16>
    %31 = vector.shape_cast %30 : vector<2x4x8x8xbf16> to vector<8x8x8xbf16>
    %32 = arith.extf %31 : vector<8x8x8xbf16> to vector<8x8x8xf32>
    %33 = arith.addf %26, %32 : vector<8x8x8xf32>
    %cst_13 = arith.constant dense<0xFF800000> : vector<8x8xf32>
    %34 = vector.multi_reduction <maximumf>, %33, %cst_13 [2] : vector<8x8x8xf32> to vector<8x8xf32>
    %35 = vector.shape_cast %34 : vector<8x8xf32> to vector<8x8x1xf32>
    %36 = vector.broadcast %35 : vector<8x8x1xf32> to vector<8x8x8xf32>
    %37 = arith.subf %33, %36 : vector<8x8x8xf32>
    %38 = math.exp %37 : vector<8x8x8xf32>
    %cst_14 = arith.constant dense<0.000000e+00> : vector<8x8xf32>
    %39 = vector.multi_reduction <add>, %38, %cst_14 [2] : vector<8x8x8xf32> to vector<8x8xf32>
    %40 = vector.shape_cast %39 : vector<8x8xf32> to vector<8x8x1xf32>
    %41 = tpu.reciprocal %40 {approx = true} : vector<8x8x1xf32> -> vector<8x8x1xf32>
    %42 = vector.broadcast %41 : vector<8x8x1xf32> to vector<8x8x8xf32>
    %43 = arith.mulf %38, %42 : vector<8x8x8xf32>
    %44 = arith.truncf %43 : vector<8x8x8xf32> to vector<8x8x8xbf16>
    "tpu.trace_start"() <{level = 10 : i32, message = "xqk,xkd->xqd"}> : () -> ()
    %cst_15 = arith.constant dense<0.000000e+00> : vector<8x8x8xf32>
    %45 = tpu.matmul %44, %25, %cst_15 {dimension_numbers = #tpu.dot_dimension_numbers<[2], [1], [1], [2], [0, 0, 0, 1, 1, 2], [0], [0]>} : vector<8x8x8xbf16>, vector<8x8x8xbf16>, vector<8x8x8xf32> -> vector<8x8x8xf32>
    "tpu.trace_stop"() : () -> ()
    %46 = arith.truncf %45 : vector<8x8x8xf32> to vector<8x8x8xbf16>
    %c0_16 = arith.constant 0 : index
    %c0_17 = arith.constant 0 : index
    %c0_18 = arith.constant 0 : index
    %47 = vector.load %arg4[%c0_16, %c0_17, %c0_18] : memref<4x8x32xbf16, #tpu.memory_space<vmem>>, vector<4x8x32xbf16>
    %48 = vector.shape_cast %47 : vector<4x8x32xbf16> to vector<1x4x8x32xbf16>
    %49 = vector.shape_cast %48 : vector<1x4x8x32xbf16> to vector<1x4x8x32xbf16>
    %50 = vector.broadcast %49 : vector<1x4x8x32xbf16> to vector<2x4x8x32xbf16>
    %51 = vector.shape_cast %50 : vector<2x4x8x32xbf16> to vector<8x8x32xbf16>
    "tpu.trace_start"() <{level = 10 : i32, message = "xqd,xdo->xqo"}> : () -> ()
    %cst_19 = arith.constant dense<0.000000e+00> : vector<8x8x32xf32>
    %52 = tpu.matmul %46, %51, %cst_19 {dimension_numbers = #tpu.dot_dimension_numbers<[2], [1], [1], [2], [0, 0, 0, 1, 1, 2], [0], [0]>} : vector<8x8x8xbf16>, vector<8x8x32xbf16>, vector<8x8x32xf32> -> vector<8x8x32xf32>
    "tpu.trace_stop"() : () -> ()
    %53 = vector.shape_cast %52 : vector<8x8x32xf32> to vector<2x4x8x32xf32>
    %cst_20 = arith.constant dense<0.000000e+00> : vector<2x8x32xf32>
    %54 = vector.multi_reduction <add>, %53, %cst_20 [1] : vector<2x4x8x32xf32> to vector<2x8x32xf32>
    %c0_21 = arith.constant 0 : index
    %c0_22 = arith.constant 0 : index
    %55 = vector.load %arg5[%c0_21, %c0_22] : memref<1x32xf32, #tpu.memory_space<vmem>>, vector<1x32xf32>
    %56 = vector.shape_cast %55 : vector<1x32xf32> to vector<1x1x32xf32>
    %57 = vector.broadcast %56 : vector<1x1x32xf32> to vector<2x8x32xf32>
    %58 = arith.addf %54, %57 : vector<2x8x32xf32>
    %c0_23 = arith.constant 0 : index
    %c0_24 = arith.constant 0 : index
    %c0_25 = arith.constant 0 : index
    %59 = vector.load %arg7[%c0_23, %c0_24, %c0_25] : memref<2x8x32xf32, #tpu.memory_space<vmem>>, vector<2x8x32xf32>
    tpu.vector_store %arg7[%c0_23, %c0_24, %c0_25], %58 {strides = array<i32>} : memref<2x8x32xf32, #tpu.memory_space<vmem>>, vector<2x8x32xf32>,
    return
  }
  func.func @transform_0(%arg0: i32) -> (i32, i32, i32) {
    %c0_i32 = arith.constant 0 : i32
    %c0_i32_0 = arith.constant 0 : i32
    %c0_i32_1 = arith.constant 0 : i32
    return %arg0, %c0_i32, %c0_i32_0 : i32, i32, i32
  }
  func.func @transform_1(%arg0: i32) -> (i32, i32, i32) {
    %c0_i32 = arith.constant 0 : i32
    %c0_i32_0 = arith.constant 0 : i32
    %c0_i32_1 = arith.constant 0 : i32
    %c0_i32_2 = arith.constant 0 : i32
    return %c0_i32, %c0_i32_0, %c0_i32_1 : i32, i32, i32
  }
  func.func @transform_2(%arg0: i32) -> (i32, i32, i32) {
    %c0_i32 = arith.constant 0 : i32
    %c0_i32_0 = arith.constant 0 : i32
    %c0_i32_1 = arith.constant 0 : i32
    %c0_i32_2 = arith.constant 0 : i32
    return %c0_i32, %c0_i32_0, %c0_i32_1 : i32, i32, i32
  }
  func.func @transform_3(%arg0: i32) -> (i32, i32, i32) {
    %c0_i32 = arith.constant 0 : i32
    %c0_i32_0 = arith.constant 0 : i32
    %c0_i32_1 = arith.constant 0 : i32
    %c0_i32_2 = arith.constant 0 : i32
    return %c0_i32, %c0_i32_0, %c0_i32_1 : i32, i32, i32
  }
  func.func @transform_4(%arg0: i32) -> (i32, i32) {
    %c0_i32 = arith.constant 0 : i32
    %c0_i32_0 = arith.constant 0 : i32
    %c0_i32_1 = arith.constant 0 : i32
    return %c0_i32, %c0_i32_0 : i32, i32
  }
  func.func @transform_5(%arg0: i32) -> (i32, i32, i32) {
    %c0_i32 = arith.constant 0 : i32
    %c0_i32_0 = arith.constant 0 : i32
    %c0_i32_1 = arith.constant 0 : i32
    return %arg0, %c0_i32, %c0_i32_0 : i32, i32, i32
  }
  func.func @transform_6(%arg0: i32) -> (i32, i32, i32) {
    %c0_i32 = arith.constant 0 : i32
    %c0_i32_0 = arith.constant 0 : i32
    %c0_i32_1 = arith.constant 0 : i32
    return %arg0, %c0_i32, %c0_i32_0 : i32, i32, i32
  }
}

</mosaic_0001>

<llo_original>
// kernel: tpu_custom_call.1
$region0: #{tpu_custom_call.1}
  #allocation0 [shape = 'u32[]', space=smem, size = 0x4, offset = 0x4, fixed_abs, tag = 'smem constant byte address 0x4 - core index']
  #allocation1 [shape = 'u32[72,128]{1,0:T(1,128)}', space=vmem, size = 0x9000, scoped, tag = 'internal scratch']
  %s0 = inlined_call_operand.vmem [shape: bf16[2,8,32], index: 0, kind: input, shape index: {}]
  %s1 = inlined_call_operand.vmem [shape: bf16[4,32,24], index: 1, kind: input, shape index: {}]
  %s2 = inlined_call_operand.vmem [shape: f32[4,1,24], index: 2, kind: input, shape index: {}]
  %s3 = inlined_call_operand.vmem [shape: bf16[4,8,32], index: 3, kind: input, shape index: {}]
  %s4 = inlined_call_operand.vmem [shape: f32[1,32], index: 4, kind: input, shape index: {}]
  %s5 = inlined_call_operand.vmem [shape: bf16[2,8,8], index: 5, kind: input, shape index: {}]
  %s6 = inlined_call_operand.hbm [shape: f32[2,8,32], index: 6, kind: output, shape index: {}]
  %s7 = sld [smem:[#allocation0]]
  $region34: #{tpu_custom_call.1} parent=0
    _
  %s9 = ssub.s32 1, %s7
  %s10 = scalar_select 0, %s9, %s7
  $region1: #{tpu_custom_call.1} parent=0
    #allocation2 [shape = 'u8[8192]{0}', space=vmem, size = 0x2000, scoped, tag = 'output window, operand 0, single buffered']
    #allocation3 [shape = 's32[1]{0}', space=sflag, size = 0x4, scoped, tag = 'scoped memory for tpu_custom_call.1']
    %11 = vsyncpa [#allocation3], 0
    // Predicated region
    $region2: #{tpu_custom_call.1} parent=1 // pred_check
      _
    $region3: #{tpu_custom_call.1} parent=1 // pred_check_branch
      %13 = sbr.rel (0) target = $region5
    $region4: #{tpu_custom_call.1} parent=1 // pred_region
      _
    $region5: #{tpu_custom_call.1} parent=1 // pred_fallthru
      _
    // Predicated region
    $region6: #{tpu_custom_call.1} parent=1 // pred_check
      _
    $region7: #{tpu_custom_call.1} parent=1 // pred_check_branch
      %15 = sbr.rel (0) target = $region9
    $region8: #{tpu_custom_call.1} parent=1 // pred_region
      _
    $region9: #{tpu_custom_call.1} parent=1 // pred_fallthru
      _
    // Predicated region
    $region10: #{tpu_custom_call.1} parent=1 // pred_check
      _
    $region11: #{tpu_custom_call.1} parent=1 // pred_check_branch
      %17 = sbr.rel (0) target = $region13
    $region12: #{tpu_custom_call.1} parent=1 // pred_region
      _
    $region13: #{tpu_custom_call.1} parent=1 // pred_fallthru
      _
    // Predicated region
    $region14: #{tpu_custom_call.1} parent=1 // pred_check
      _
    $region15: #{tpu_custom_call.1} parent=1 // pred_check_branch
      %19 = sbr.rel (0) target = $region17
    $region16: #{tpu_custom_call.1} parent=1 // pred_region
      _
    $region17: #{tpu_custom_call.1} parent=1 // pred_fallthru
      _
    // Predicated region
    $region18: #{tpu_custom_call.1} parent=1 // pred_check
      _
    $region19: #{tpu_custom_call.1} parent=1 // pred_check_branch
      %21 = sbr.rel (0) target = $region21
    $region20: #{tpu_custom_call.1} parent=1 // pred_region
      _
    $region21: #{tpu_custom_call.1} parent=1 // pred_fallthru
      _
    // Predicated region
    $region22: #{tpu_custom_call.1} parent=1 // pred_check
      _
    $region23: #{tpu_custom_call.1} parent=1 // pred_check_branch
      %23 = sbr.rel (0) target = $region25
    $region24: #{tpu_custom_call.1} parent=1 // pred_region
      _
    $region25: #{tpu_custom_call.1} parent=1 // pred_fallthru
      _
    %v25 = vld [vmem:[%s0] sm:$0xf]
    %v26 = vld [vmem:[%s0 + $0x4] sm:$0xf]
    %v27 = vld [vmem:[%s1] sm:$0xf]
    %v28 = vld [vmem:[%s1 + $0x4] sm:$0xf]
    %v29 = vld [vmem:[%s1 + $0x8] sm:$0xf]
    %v30 = vld [vmem:[%s1 + $0xc] sm:$0xf]
    %v31 = vld [vmem:[%s1 + $0x10] sm:$0xf]
    %v32 = vld [vmem:[%s1 + $0x14] sm:$0xf]
    %v33 = vld [vmem:[%s1 + $0x18] sm:$0xf]
    %v34 = vld [vmem:[%s1 + $0x1c] sm:$0xf]
    %v35 = vld [vmem:[%s1 + $0x20] sm:$0xf]
    %v36 = vld [vmem:[%s1 + $0x24] sm:$0xf]
    %v37 = vld [vmem:[%s1 + $0x28] sm:$0xf]
    %v38 = vld [vmem:[%s1 + $0x2c] sm:$0xf]
    %v39 = vld [vmem:[%s1 + $0x30] sm:$0xf]
    %v40 = vld [vmem:[%s1 + $0x34] sm:$0xf]
    %v41 = vld [vmem:[%s1 + $0x38] sm:$0xf]
    %v42 = vld [vmem:[%s1 + $0x3c] sm:$0xf]
    %v43 = vld [vmem:[%s2] sm:$0x1]
    %v44 = vld [vmem:[%s2 + $0x1] sm:$0x1]
    %v45 = vld [vmem:[%s2 + $0x2] sm:$0x1]
    %v46 = vld [vmem:[%s2 + $0x3] sm:$0x1]
    %v51 = vperm.slane %v43, 0
    %v52 = vperm.slane %v44, 0
    %v53 = vperm.slane %v45, 0
    %v54 = vperm.slane %v46, 0
    %v63 = vunpack.c.l.b16 %v27
    %v64 = vunpack.c.l.b16 %v28
    %v65 = vunpack.c.l.b16 %v29
    %v66 = vunpack.c.l.b16 %v30
    %v67 = vpack.c.b16 %v64, %v63
    %v68 = vpack.c.b16 %v66, %v65
    %vm71 = vcmask 261120
    %v73 = vsel %vm71, %v25, 0
    %75 = vmatpush.bf16.msra.mxu0 0
    %76 = vmatpush.bf16.msra.mxu0 0
    %77 = vmatpush.bf16.msra.mxu0 0
    %78 = vmatpush.bf16.msra.mxu0 0
    %79 = vmatpush.bf16.msra.mxu0 0
    %80 = vmatpush.bf16.msra.mxu0 0
    %81 = vmatpush.bf16.msra.mxu0 %v68
    %82 = vmatpush.bf16.msra.mxu0 %v67
    %83 = vmatmul.bf16.gmra.mxu0 %v73
    %v84 = vpop.f32.mrf.mxu0
    %v85 = vadd.f32 %v51, %v84
    %v86 = vpop.f32.mrf.mxu0
    %87 = vdwg.mxu0
    %v92 = vunpack.c.l.b16 %v31
    %v93 = vunpack.c.l.b16 %v32
    %v94 = vunpack.c.l.b16 %v33
    %v95 = vunpack.c.l.b16 %v34
    %v96 = vpack.c.b16 %v93, %v92
    %v97 = vpack.c.b16 %v95, %v94
    %100 = vmatpush.bf16.msra.mxu0 0
    %101 = vmatpush.bf16.msra.mxu0 0
    %102 = vmatpush.bf16.msra.mxu0 0
    %103 = vmatpush.bf16.msra.mxu0 0
    %104 = vmatpush.bf16.msra.mxu0 0
    %105 = vmatpush.bf16.msra.mxu0 0
    %106 = vmatpush.bf16.msra.mxu0 %v97
    %107 = vmatpush.bf16.msra.mxu0 %v96
    %108 = vmatmul.bf16.gmra.mxu0 %v73
    %v109 = vpop.f32.mrf.mxu0
    %v110 = vadd.f32 %v52, %v109
    %v111 = vpop.f32.mrf.mxu0
    %112 = vdwg.mxu0
    %v117 = vunpack.c.l.b16 %v35
    %v118 = vunpack.c.l.b16 %v36
    %v119 = vunpack.c.l.b16 %v37
    %v120 = vunpack.c.l.b16 %v38
    %v121 = vpack.c.b16 %v118, %v117
    %v122 = vpack.c.b16 %v120, %v119
    %125 = vmatpush.bf16.msra.mxu0 0
    %126 = vmatpush.bf16.msra.mxu0 0
    %127 = vmatpush.bf16.msra.mxu0 0
    %128 = vmatpush.bf16.msra.mxu0 0
    %129 = vmatpush.bf16.msra.mxu0 0
    %130 = vmatpush.bf16.msra.mxu0 0
    %131 = vmatpush.bf16.msra.mxu0 %v122
    %132 = vmatpush.bf16.msra.mxu0 %v121
    %133 = vmatmul.bf16.gmra.mxu0 %v73
    %v134 = vpop.f32.mrf.mxu0
    %v135 = vadd.f32 %v53, %v134
    %v136 = vpop.f32.mrf.mxu0
    %137 = vdwg.mxu0
    %v142 = vunpack.c.l.b16 %v39
    %v143 = vunpack.c.l.b16 %v40
    %v144 = vunpack.c.l.b16 %v41
    %v145 = vunpack.c.l.b16 %v42
    %v146 = vpack.c.b16 %v143, %v142
    %v147 = vpack.c.b16 %v145, %v144
    %150 = vmatpush.bf16.msra.mxu0 0
    %151 = vmatpush.bf16.msra.mxu0 0
    %152 = vmatpush.bf16.msra.mxu0 0
    %153 = vmatpush.bf16.msra.mxu0 0
    %154 = vmatpush.bf16.msra.mxu0 0
    %155 = vmatpush.bf16.msra.mxu0 0
    %156 = vmatpush.bf16.msra.mxu0 %v147
    %157 = vmatpush.bf16.msra.mxu0 %v146
    %158 = vmatmul.bf16.gmra.mxu0 %v73
    %v159 = vpop.f32.mrf.mxu0
    %v160 = vadd.f32 %v54, %v159
    %v161 = vpop.f32.mrf.mxu0
    %162 = vdwg.mxu0
    %v164 = vsel %vm71, %v26, 0
    %166 = vmatpush.bf16.msra.mxu0 0
    %167 = vmatpush.bf16.msra.mxu0 0
    %168 = vmatpush.bf16.msra.mxu0 0
    %169 = vmatpush.bf16.msra.mxu0 0
    %170 = vmatpush.bf16.msra.mxu0 0
    %171 = vmatpush.bf16.msra.mxu0 0
    %172 = vmatpush.bf16.msra.mxu0 %v68
    %173 = vmatpush.bf16.msra.mxu0 %v67
    %174 = vmatmul.bf16.gmra.mxu0 %v164
    %v175 = vpop.f32.mrf.mxu0
    %v176 = vadd.f32 %v51, %v175
    %v177 = vpop.f32.mrf.mxu0
    %178 = vdwg.mxu0
    %179 = vmatpush.bf16.msra.mxu0 0
    %180 = vmatpush.bf16.msra.mxu0 0
    %181 = vmatpush.bf16.msra.mxu0 0
    %182 = vmatpush.bf16.msra.mxu0 0
    %183 = vmatpush.bf16.msra.mxu0 0
    %184 = vmatpush.bf16.msra.mxu0 0
    %185 = vmatpush.bf16.msra.mxu0 %v97
    %186 = vmatpush.bf16.msra.mxu0 %v96
    %187 = vmatmul.bf16.gmra.mxu0 %v164
    %v188 = vpop.f32.mrf.mxu0
    %v189 = vadd.f32 %v52, %v188
    %v190 = vpop.f32.mrf.mxu0
    %191 = vdwg.mxu0
    %192 = vmatpush.bf16.msra.mxu0 0
    %193 = vmatpush.bf16.msra.mxu0 0
    %194 = vmatpush.bf16.msra.mxu0 0
    %195 = vmatpush.bf16.msra.mxu0 0
    %196 = vmatpush.bf16.msra.mxu0 0
    %197 = vmatpush.bf16.msra.mxu0 0
    %198 = vmatpush.bf16.msra.mxu0 %v122
    %199 = vmatpush.bf16.msra.mxu0 %v121
    %200 = vmatmul.bf16.gmra.mxu0 %v164
    %v201 = vpop.f32.mrf.mxu0
    %v202 = vadd.f32 %v53, %v201
    %v203 = vpop.f32.mrf.mxu0
    %204 = vdwg.mxu0
    %205 = vmatpush.bf16.msra.mxu0 0
    %206 = vmatpush.bf16.msra.mxu0 0
    %207 = vmatpush.bf16.msra.mxu0 0
    %208 = vmatpush.bf16.msra.mxu0 0
    %209 = vmatpush.bf16.msra.mxu0 0
    %210 = vmatpush.bf16.msra.mxu0 0
    %211 = vmatpush.bf16.msra.mxu0 %v147
    %212 = vmatpush.bf16.msra.mxu0 %v146
    %213 = vmatmul.bf16.gmra.mxu0 %v164
    %v214 = vpop.f32.mrf.mxu0
    %v215 = vadd.f32 %v54, %v214
    %v216 = vpop.f32.mrf.mxu0
    %217 = vdwg.mxu0
    %v218 = vmul.f32 %v85, 0.35355338
    %v219 = vmul.f32 %v110, 0.35355338
    %v220 = vmul.f32 %v135, 0.35355338
    %v221 = vmul.f32 %v160, 0.35355338
    %v222 = vmul.f32 %v176, 0.35355338
    %v223 = vmul.f32 %v189, 0.35355338
    %v224 = vmul.f32 %v202, 0.35355338
    %v225 = vmul.f32 %v215, 0.35355338
    %v226 = vpack.c.bf16 %v218, %v218
    %v227 = vpack.c.bf16 %v219, %v219
    %v228 = vpack.c.bf16 %v220, %v220
    %v229 = vpack.c.bf16 %v221, %v221
    %v230 = vpack.c.bf16 %v222, %v222
    %v231 = vpack.c.bf16 %v223, %v223
    %v232 = vpack.c.bf16 %v224, %v224
    %v233 = vpack.c.bf16 %v225, %v225
    %v234 = vpack.c.bf16 %v85, %v85
    %v235 = vpack.c.bf16 %v110, %v110
    %v236 = vpack.c.bf16 %v135, %v135
    %v237 = vpack.c.bf16 %v160, %v160
    %v238 = vpack.c.bf16 %v176, %v176
    %v239 = vpack.c.bf16 %v189, %v189
    %v240 = vpack.c.bf16 %v202, %v202
    %v241 = vpack.c.bf16 %v215, %v215
    %v242 = vld [vmem:[%s5] sm:$0xf]
    %v243 = vld [vmem:[%s5 + $0x4] sm:$0xf]
    %v244 = vunpack.c.l.bf16 %v242
    %v245 = vunpack.c.l.bf16 %v243
    %v247 = vunpack.c.l.b16 %v234
    %v248 = vpack.c.b16 %v247, %v247
    %249 = vrot.lane.b32.xlu0 %v248, 120
    %v250 = vpop.permute.xlu0 %249
    %vm251 = vcmask 64512
    %v253 = vsel %vm251, %v226, 0
    %v256 = vsel %vm251, %v250, 0
    %258 = vmatpush.bf16.xpose.msra.mxu0 0
    %259 = vmatpush.bf16.xpose.msra.mxu0 0
    %260 = vmatpush.bf16.xpose.msra.mxu0 0
    %261 = vmatpush.bf16.xpose.msra.mxu0 0
    %262 = vmatpush.bf16.xpose.msra.mxu0 0
    %263 = vmatpush.bf16.xpose.msra.mxu0 0
    %264 = vmatpush.bf16.xpose.msra.mxu0 0
    %265 = vmatpush.bf16.xpose.msra.mxu0 %v256
    %266 = vmatmul.bf16.gmra.mxu0 %v253
    %v267 = vpop.f32.mrf.mxu0
    %v268 = vadd.f32 %v244, %v267
    %v269 = vpop.f32.mrf.mxu0
    %270 = vdwg.mxu0
    %v272 = vunpack.c.l.b16 %v235
    %v273 = vpack.c.b16 %v272, %v272
    %274 = vrot.lane.b32.xlu0 %v273, 120
    %v275 = vpop.permute.xlu0 %274
    %v277 = vsel %vm251, %v227, 0
    %v280 = vsel %vm251, %v275, 0
    %282 = vmatpush.bf16.xpose.msra.mxu0 0
    %283 = vmatpush.bf16.xpose.msra.mxu0 0
    %284 = vmatpush.bf16.xpose.msra.mxu0 0
    %285 = vmatpush.bf16.xpose.msra.mxu0 0
    %286 = vmatpush.bf16.xpose.msra.mxu0 0
    %287 = vmatpush.bf16.xpose.msra.mxu0 0
    %288 = vmatpush.bf16.xpose.msra.mxu0 0
    %289 = vmatpush.bf16.xpose.msra.mxu0 %v280
    %290 = vmatmul.bf16.gmra.mxu0 %v277
    %v291 = vpop.f32.mrf.mxu0
    %v292 = vadd.f32 %v244, %v291
    %v293 = vpop.f32.mrf.mxu0
    %294 = vdwg.mxu0
    %v296 = vunpack.c.l.b16 %v236
    %v297 = vpack.c.b16 %v296, %v296
    %298 = vrot.lane.b32.xlu0 %v297, 120
    %v299 = vpop.permute.xlu0 %298
    %v301 = vsel %vm251, %v228, 0
    %v304 = vsel %vm251, %v299, 0
    %306 = vmatpush.bf16.xpose.msra.mxu0 0
    %307 = vmatpush.bf16.xpose.msra.mxu0 0
    %308 = vmatpush.bf16.xpose.msra.mxu0 0
    %309 = vmatpush.bf16.xpose.msra.mxu0 0
    %310 = vmatpush.bf16.xpose.msra.mxu0 0
    %311 = vmatpush.bf16.xpose.msra.mxu0 0
    %312 = vmatpush.bf16.xpose.msra.mxu0 0
    %313 = vmatpush.bf16.xpose.msra.mxu0 %v304
    %314 = vmatmul.bf16.gmra.mxu0 %v301
    %v315 = vpop.f32.mrf.mxu0
    %v316 = vadd.f32 %v244, %v315
    %v317 = vpop.f32.mrf.mxu0
    %318 = vdwg.mxu0
    %v320 = vunpack.c.l.b16 %v237
    %v321 = vpack.c.b16 %v320, %v320
    %322 = vrot.lane.b32.xlu0 %v321, 120
    %v323 = vpop.permute.xlu0 %322
    %v325 = vsel %vm251, %v229, 0
    %v328 = vsel %vm251, %v323, 0
    %330 = vmatpush.bf16.xpose.msra.mxu0 0
    %331 = vmatpush.bf16.xpose.msra.mxu0 0
    %332 = vmatpush.bf16.xpose.msra.mxu0 0
    %333 = vmatpush.bf16.xpose.msra.mxu0 0
    %334 = vmatpush.bf16.xpose.msra.mxu0 0
    %335 = vmatpush.bf16.xpose.msra.mxu0 0
    %336 = vmatpush.bf16.xpose.msra.mxu0 0
    %337 = vmatpush.bf16.xpose.msra.mxu0 %v328
    %338 = vmatmul.bf16.gmra.mxu0 %v325
    %v339 = vpop.f32.mrf.mxu0
    %v340 = vadd.f32 %v244, %v339
    %v341 = vpop.f32.mrf.mxu0
    %342 = vdwg.mxu0
    %v344 = vunpack.c.l.b16 %v238
    %v345 = vpack.c.b16 %v344, %v344
    %346 = vrot.lane.b32.xlu0 %v345, 120
    %v347 = vpop.permute.xlu0 %346
    %v349 = vsel %vm251, %v230, 0
    %v352 = vsel %vm251, %v347, 0
    %354 = vmatpush.bf16.xpose.msra.mxu0 0
    %355 = vmatpush.bf16.xpose.msra.mxu0 0
    %356 = vmatpush.bf16.xpose.msra.mxu0 0
    %357 = vmatpush.bf16.xpose.msra.mxu0 0
    %358 = vmatpush.bf16.xpose.msra.mxu0 0
    %359 = vmatpush.bf16.xpose.msra.mxu0 0
    %360 = vmatpush.bf16.xpose.msra.mxu0 0
    %361 = vmatpush.bf16.xpose.msra.mxu0 %v352
    %362 = vmatmul.bf16.gmra.mxu0 %v349
    %v363 = vpop.f32.mrf.mxu0
    %v364 = vadd.f32 %v245, %v363
    %v365 = vpop.f32.mrf.mxu0
    %366 = vdwg.mxu0
    %v368 = vunpack.c.l.b16 %v239
    %v369 = vpack.c.b16 %v368, %v368
    %370 = vrot.lane.b32.xlu0 %v369, 120
    %v371 = vpop.permute.xlu0 %370
    %v373 = vsel %vm251, %v231, 0
    %v376 = vsel %vm251, %v371, 0
    %378 = vmatpush.bf16.xpose.msra.mxu0 0
    %379 = vmatpush.bf16.xpose.msra.mxu0 0
    %380 = vmatpush.bf16.xpose.msra.mxu0 0
    %381 = vmatpush.bf16.xpose.msra.mxu0 0
    %382 = vmatpush.bf16.xpose.msra.mxu0 0
    %383 = vmatpush.bf16.xpose.msra.mxu0 0
    %384 = vmatpush.bf16.xpose.msra.mxu0 0
    %385 = vmatpush.bf16.xpose.msra.mxu0 %v376
    %386 = vmatmul.bf16.gmra.mxu0 %v373
    %v387 = vpop.f32.mrf.mxu0
    %v388 = vadd.f32 %v245, %v387
    %v389 = vpop.f32.mrf.mxu0
    %390 = vdwg.mxu0
    %v392 = vunpack.c.l.b16 %v240
    %v393 = vpack.c.b16 %v392, %v392
    %394 = vrot.lane.b32.xlu0 %v393, 120
    %v395 = vpop.permute.xlu0 %394
    %v397 = vsel %vm251, %v232, 0
    %v400 = vsel %vm251, %v395, 0
    %402 = vmatpush.bf16.xpose.msra.mxu0 0
    %403 = vmatpush.bf16.xpose.msra.mxu0 0
    %404 = vmatpush.bf16.xpose.msra.mxu0 0
    %405 = vmatpush.bf16.xpose.msra.mxu0 0
    %406 = vmatpush.bf16.xpose.msra.mxu0 0
    %407 = vmatpush.bf16.xpose.msra.mxu0 0
    %408 = vmatpush.bf16.xpose.msra.mxu0 0
    %409 = vmatpush.bf16.xpose.msra.mxu0 %v400
    %410 = vmatmul.bf16.gmra.mxu0 %v397
    %v411 = vpop.f32.mrf.mxu0
    %v412 = vadd.f32 %v245, %v411
    %v413 = vpop.f32.mrf.mxu0
    %414 = vdwg.mxu0
    %v416 = vunpack.c.l.b16 %v241
    %v417 = vpack.c.b16 %v416, %v416
    %418 = vrot.lane.b32.xlu0 %v417, 120
    %v419 = vpop.permute.xlu0 %418
    %v421 = vsel %vm251, %v233, 0
    %v424 = vsel %vm251, %v419, 0
    %426 = vmatpush.bf16.xpose.msra.mxu0 0
    %427 = vmatpush.bf16.xpose.msra.mxu0 0
    %428 = vmatpush.bf16.xpose.msra.mxu0 0
    %429 = vmatpush.bf16.xpose.msra.mxu0 0
    %430 = vmatpush.bf16.xpose.msra.mxu0 0
    %431 = vmatpush.bf16.xpose.msra.mxu0 0
    %432 = vmatpush.bf16.xpose.msra.mxu0 0
    %433 = vmatpush.bf16.xpose.msra.mxu0 %v424
    %434 = vmatmul.bf16.gmra.mxu0 %v421
    %v435 = vpop.f32.mrf.mxu0
    %v436 = vadd.f32 %v245, %v435
    %v437 = vpop.f32.mrf.mxu0
    %438 = vdwg.mxu0
    %v439 = vsel %vm251, %v268, -inf
    %440 = vmax.xlane.f32.xlu0 %v439
    %v441 = vpop.xlane.xlu0 %440
    %v442 = vsel %vm251, %v292, -inf
    %443 = vmax.xlane.f32.xlu0 %v442
    %v444 = vpop.xlane.xlu0 %443
    %v445 = vsel %vm251, %v316, -inf
    %446 = vmax.xlane.f32.xlu0 %v445
    %v447 = vpop.xlane.xlu0 %446
    %v448 = vsel %vm251, %v340, -inf
    %449 = vmax.xlane.f32.xlu0 %v448
    %v450 = vpop.xlane.xlu0 %449
    %v451 = vsel %vm251, %v364, -inf
    %452 = vmax.xlane.f32.xlu0 %v451
    %v453 = vpop.xlane.xlu0 %452
    %v454 = vsel %vm251, %v388, -inf
    %455 = vmax.xlane.f32.xlu0 %v454
    %v456 = vpop.xlane.xlu0 %455
    %v457 = vsel %vm251, %v412, -inf
    %458 = vmax.xlane.f32.xlu0 %v457
    %v459 = vpop.xlane.xlu0 %458
    %v460 = vsel %vm251, %v436, -inf
    %461 = vmax.xlane.f32.xlu0 %v460
    %v462 = vpop.xlane.xlu0 %461
    %v463 = vsub.f32 %v268, %v441
    %v464 = vsub.f32 %v292, %v444
    %v465 = vsub.f32 %v316, %v447
    %v466 = vsub.f32 %v340, %v450
    %v467 = vsub.f32 %v364, %v453
    %v468 = vsub.f32 %v388, %v456
    %v469 = vsub.f32 %v412, %v459
    %v470 = vsub.f32 %v436, %v462
    %v471 = vmul.f32 %v463, 1.442695
    %v472 = vpow.pop %v471
    %v473 = vmul.f32 %v464, 1.442695
    %v474 = vpow.pop %v473
    %v475 = vmul.f32 %v465, 1.442695
    %v476 = vpow.pop %v475
    %v477 = vmul.f32 %v466, 1.442695
    %v478 = vpow.pop %v477
    %v479 = vmul.f32 %v467, 1.442695
    %v480 = vpow.pop %v479
    %v481 = vmul.f32 %v468, 1.442695
    %v482 = vpow.pop %v481
    %v483 = vmul.f32 %v469, 1.442695
    %v484 = vpow.pop %v483
    %v485 = vmul.f32 %v470, 1.442695
    %v486 = vpow.pop %v485
    %v487 = vsel %vm251, %v472, 0.0
    %488 = vadd.xlane.f32.xlu0 %v487
    %v489 = vpop.xlane.xlu0 %488
    %v490 = vsel %vm251, %v474, 0.0
    %491 = vadd.xlane.f32.xlu0 %v490
    %v492 = vpop.xlane.xlu0 %491
    %v493 = vsel %vm251, %v476, 0.0
    %494 = vadd.xlane.f32.xlu0 %v493
    %v495 = vpop.xlane.xlu0 %494
    %v496 = vsel %vm251, %v478, 0.0
    %497 = vadd.xlane.f32.xlu0 %v496
    %v498 = vpop.xlane.xlu0 %497
    %v499 = vsel %vm251, %v480, 0.0
    %500 = vadd.xlane.f32.xlu0 %v499
    %v501 = vpop.xlane.xlu0 %500
    %v502 = vsel %vm251, %v482, 0.0
    %503 = vadd.xlane.f32.xlu0 %v502
    %v504 = vpop.xlane.xlu0 %503
    %v505 = vsel %vm251, %v484, 0.0
    %506 = vadd.xlane.f32.xlu0 %v505
    %v507 = vpop.xlane.xlu0 %506
    %v508 = vsel %vm251, %v486, 0.0
    %509 = vadd.xlane.f32.xlu0 %v508
    %v510 = vpop.xlane.xlu0 %509
    %v511 = vrcp.pop %v489
    %v512 = vrcp.pop %v492
    %v513 = vrcp.pop %v495
    %v514 = vrcp.pop %v498
    %v515 = vrcp.pop %v501
    %v516 = vrcp.pop %v504
    %v517 = vrcp.pop %v507
    %v518 = vrcp.pop %v510
    %v519 = vmul.f32 %v472, %v511
    %v520 = vmul.f32 %v474, %v512
    %v521 = vmul.f32 %v476, %v513
    %v522 = vmul.f32 %v478, %v514
    %v523 = vmul.f32 %v480, %v515
    %v524 = vmul.f32 %v482, %v516
    %v525 = vmul.f32 %v484, %v517
    %v526 = vmul.f32 %v486, %v518
    %v527 = vpack.c.bf16 %v519, %v519
    %v528 = vpack.c.bf16 %v520, %v520
    %v529 = vpack.c.bf16 %v521, %v521
    %v530 = vpack.c.bf16 %v522, %v522
    %v531 = vpack.c.bf16 %v523, %v523
    %v532 = vpack.c.bf16 %v524, %v524
    %v533 = vpack.c.bf16 %v525, %v525
    %v534 = vpack.c.bf16 %v526, %v526
    %535 = vrot.lane.b32.xlu0 %v248, 112
    %v536 = vpop.permute.xlu0 %535
    %v538 = vsel %vm251, %v527, 0
    %vm540 = vcmask 1043456
    %v542 = vsel %vm540, %v536, 0
    %544 = vmatpush.bf16.msra.mxu0 0
    %545 = vmatpush.bf16.msra.mxu0 0
    %546 = vmatpush.bf16.msra.mxu0 0
    %547 = vmatpush.bf16.msra.mxu0 0
    %548 = vmatpush.bf16.msra.mxu0 0
    %549 = vmatpush.bf16.msra.mxu0 0
    %550 = vmatpush.bf16.msra.mxu0 0
    %551 = vmatpush.bf16.msra.mxu0 %v542
    %552 = vmatmul.bf16.gmra.mxu0 %v538
    %v553 = vpop.f32.mrf.mxu0
    %v554 = vadd.f32 0.0, %v553
    %v555 = vpop.f32.mrf.mxu0
    %556 = vdwg.mxu0
    %557 = vrot.lane.b32.xlu0 %v273, 112
    %v558 = vpop.permute.xlu0 %557
    %v560 = vsel %vm251, %v528, 0
    %v563 = vsel %vm540, %v558, 0
    %565 = vmatpush.bf16.msra.mxu0 0
    %566 = vmatpush.bf16.msra.mxu0 0
    %567 = vmatpush.bf16.msra.mxu0 0
    %568 = vmatpush.bf16.msra.mxu0 0
    %569 = vmatpush.bf16.msra.mxu0 0
    %570 = vmatpush.bf16.msra.mxu0 0
    %571 = vmatpush.bf16.msra.mxu0 0
    %572 = vmatpush.bf16.msra.mxu0 %v563
    %573 = vmatmul.bf16.gmra.mxu0 %v560
    %v574 = vpop.f32.mrf.mxu0
    %v575 = vadd.f32 0.0, %v574
    %v576 = vpop.f32.mrf.mxu0
    %577 = vdwg.mxu0
    %578 = vrot.lane.b32.xlu0 %v297, 112
    %v579 = vpop.permute.xlu0 %578
    %v581 = vsel %vm251, %v529, 0
    %v584 = vsel %vm540, %v579, 0
    %586 = vmatpush.bf16.msra.mxu0 0
    %587 = vmatpush.bf16.msra.mxu0 0
    %588 = vmatpush.bf16.msra.mxu0 0
    %589 = vmatpush.bf16.msra.mxu0 0
    %590 = vmatpush.bf16.msra.mxu0 0
    %591 = vmatpush.bf16.msra.mxu0 0
    %592 = vmatpush.bf16.msra.mxu0 0
    %593 = vmatpush.bf16.msra.mxu0 %v584
    %594 = vmatmul.bf16.gmra.mxu0 %v581
    %v595 = vpop.f32.mrf.mxu0
    %v596 = vadd.f32 0.0, %v595
    %v597 = vpop.f32.mrf.mxu0
    %598 = vdwg.mxu0
    %599 = vrot.lane.b32.xlu0 %v321, 112
    %v600 = vpop.permute.xlu0 %599
    %v602 = vsel %vm251, %v530, 0
    %v605 = vsel %vm540, %v600, 0
    %607 = vmatpush.bf16.msra.mxu0 0
    %608 = vmatpush.bf16.msra.mxu0 0
    %609 = vmatpush.bf16.msra.mxu0 0
    %610 = vmatpush.bf16.msra.mxu0 0
    %611 = vmatpush.bf16.msra.mxu0 0
    %612 = vmatpush.bf16.msra.mxu0 0
    %613 = vmatpush.bf16.msra.mxu0 0
    %614 = vmatpush.bf16.msra.mxu0 %v605
    %615 = vmatmul.bf16.gmra.mxu0 %v602
    %v616 = vpop.f32.mrf.mxu0
    %v617 = vadd.f32 0.0, %v616
    %v618 = vpop.f32.mrf.mxu0
    %619 = vdwg.mxu0
    %620 = vrot.lane.b32.xlu0 %v345, 112
    %v621 = vpop.permute.xlu0 %620
    %v623 = vsel %vm251, %v531, 0
    %v626 = vsel %vm540, %v621, 0
    %628 = vmatpush.bf16.msra.mxu0 0
    %629 = vmatpush.bf16.msra.mxu0 0
    %630 = vmatpush.bf16.msra.mxu0 0
    %631 = vmatpush.bf16.msra.mxu0 0
    %632 = vmatpush.bf16.msra.mxu0 0
    %633 = vmatpush.bf16.msra.mxu0 0
    %634 = vmatpush.bf16.msra.mxu0 0
    %635 = vmatpush.bf16.msra.mxu0 %v626
    %636 = vmatmul.bf16.gmra.mxu0 %v623
    %v637 = vpop.f32.mrf.mxu0
    %v638 = vadd.f32 0.0, %v637
    %v639 = vpop.f32.mrf.mxu0
    %640 = vdwg.mxu0
    %641 = vrot.lane.b32.xlu0 %v369, 112
    %v642 = vpop.permute.xlu0 %641
    %v644 = vsel %vm251, %v532, 0
    %v647 = vsel %vm540, %v642, 0
    %649 = vmatpush.bf16.msra.mxu0 0
    %650 = vmatpush.bf16.msra.mxu0 0
    %651 = vmatpush.bf16.msra.mxu0 0
    %652 = vmatpush.bf16.msra.mxu0 0
    %653 = vmatpush.bf16.msra.mxu0 0
    %654 = vmatpush.bf16.msra.mxu0 0
    %655 = vmatpush.bf16.msra.mxu0 0
    %656 = vmatpush.bf16.msra.mxu0 %v647
    %657 = vmatmul.bf16.gmra.mxu0 %v644
    %v658 = vpop.f32.mrf.mxu0
    %v659 = vadd.f32 0.0, %v658
    %v660 = vpop.f32.mrf.mxu0
    %661 = vdwg.mxu0
    %662 = vrot.lane.b32.xlu0 %v393, 112
    %v663 = vpop.permute.xlu0 %662
    %v665 = vsel %vm251, %v533, 0
    %v668 = vsel %vm540, %v663, 0
    %670 = vmatpush.bf16.msra.mxu0 0
    %671 = vmatpush.bf16.msra.mxu0 0
    %672 = vmatpush.bf16.msra.mxu0 0
    %673 = vmatpush.bf16.msra.mxu0 0
    %674 = vmatpush.bf16.msra.mxu0 0
    %675 = vmatpush.bf16.msra.mxu0 0
    %676 = vmatpush.bf16.msra.mxu0 0
    %677 = vmatpush.bf16.msra.mxu0 %v668
    %678 = vmatmul.bf16.gmra.mxu0 %v665
    %v679 = vpop.f32.mrf.mxu0
    %v680 = vadd.f32 0.0, %v679
    %v681 = vpop.f32.mrf.mxu0
    %682 = vdwg.mxu0
    %683 = vrot.lane.b32.xlu0 %v417, 112
    %v684 = vpop.permute.xlu0 %683
    %v686 = vsel %vm251, %v534, 0
    %v689 = vsel %vm540, %v684, 0
    %691 = vmatpush.bf16.msra.mxu0 0
    %692 = vmatpush.bf16.msra.mxu0 0
    %693 = vmatpush.bf16.msra.mxu0 0
    %694 = vmatpush.bf16.msra.mxu0 0
    %695 = vmatpush.bf16.msra.mxu0 0
    %696 = vmatpush.bf16.msra.mxu0 0
    %697 = vmatpush.bf16.msra.mxu0 0
    %698 = vmatpush.bf16.msra.mxu0 %v689
    %699 = vmatmul.bf16.gmra.mxu0 %v686
    %v700 = vpop.f32.mrf.mxu0
    %v701 = vadd.f32 0.0, %v700
    %v702 = vpop.f32.mrf.mxu0
    %703 = vdwg.mxu0
    %v704 = vpack.c.bf16 %v554, %v554
    %v705 = vpack.c.bf16 %v575, %v575
    %v706 = vpack.c.bf16 %v596, %v596
    %v707 = vpack.c.bf16 %v617, %v617
    %v708 = vpack.c.bf16 %v638, %v638
    %v709 = vpack.c.bf16 %v659, %v659
    %v710 = vpack.c.bf16 %v680, %v680
    %v711 = vpack.c.bf16 %v701, %v701
    %v712 = vld [vmem:[%s3] sm:$0xf]
    %v713 = vld [vmem:[%s3 + $0x4] sm:$0xf]
    %v714 = vld [vmem:[%s3 + $0x8] sm:$0xf]
    %v715 = vld [vmem:[%s3 + $0xc] sm:$0xf]
    %v717 = vsel %vm251, %v704, 0
    %v720 = vsel %vm540, %v712, 0
    %722 = vmatpush.bf16.msra.mxu0 0
    %723 = vmatpush.bf16.msra.mxu0 0
    %724 = vmatpush.bf16.msra.mxu0 0
    %725 = vmatpush.bf16.msra.mxu0 0
    %726 = vmatpush.bf16.msra.mxu0 0
    %727 = vmatpush.bf16.msra.mxu0 0
    %728 = vmatpush.bf16.msra.mxu0 0
    %729 = vmatpush.bf16.msra.mxu0 %v720
    %730 = vmatmul.bf16.gmra.mxu0 %v717
    %v731 = vpop.f32.mrf.mxu0
    %v732 = vadd.f32 0.0, %v731
    %v733 = vpop.f32.mrf.mxu0
    %734 = vdwg.mxu0
    %v736 = vsel %vm251, %v705, 0
    %v739 = vsel %vm540, %v713, 0
    %741 = vmatpush.bf16.msra.mxu0 0
    %742 = vmatpush.bf16.msra.mxu0 0
    %743 = vmatpush.bf16.msra.mxu0 0
    %744 = vmatpush.bf16.msra.mxu0 0
    %745 = vmatpush.bf16.msra.mxu0 0
    %746 = vmatpush.bf16.msra.mxu0 0
    %747 = vmatpush.bf16.msra.mxu0 0
    %748 = vmatpush.bf16.msra.mxu0 %v739
    %749 = vmatmul.bf16.gmra.mxu0 %v736
    %v750 = vpop.f32.mrf.mxu0
    %v751 = vadd.f32 0.0, %v750
    %v752 = vpop.f32.mrf.mxu0
    %753 = vdwg.mxu0
    %v755 = vsel %vm251, %v706, 0
    %v758 = vsel %vm540, %v714, 0
    %760 = vmatpush.bf16.msra.mxu0 0
    %761 = vmatpush.bf16.msra.mxu0 0
    %762 = vmatpush.bf16.msra.mxu0 0
    %763 = vmatpush.bf16.msra.mxu0 0
    %764 = vmatpush.bf16.msra.mxu0 0
    %765 = vmatpush.bf16.msra.mxu0 0
    %766 = vmatpush.bf16.msra.mxu0 0
    %767 = vmatpush.bf16.msra.mxu0 %v758
    %768 = vmatmul.bf16.gmra.mxu0 %v755
    %v769 = vpop.f32.mrf.mxu0
    %v770 = vadd.f32 0.0, %v769
    %v771 = vpop.f32.mrf.mxu0
    %772 = vdwg.mxu0
    %v774 = vsel %vm251, %v707, 0
    %v777 = vsel %vm540, %v715, 0
    %779 = vmatpush.bf16.msra.mxu0 0
    %780 = vmatpush.bf16.msra.mxu0 0
    %781 = vmatpush.bf16.msra.mxu0 0
    %782 = vmatpush.bf16.msra.mxu0 0
    %783 = vmatpush.bf16.msra.mxu0 0
    %784 = vmatpush.bf16.msra.mxu0 0
    %785 = vmatpush.bf16.msra.mxu0 0
    %786 = vmatpush.bf16.msra.mxu0 %v777
    %787 = vmatmul.bf16.gmra.mxu0 %v774
    %v788 = vpop.f32.mrf.mxu0
    %v789 = vadd.f32 0.0, %v788
    %v790 = vpop.f32.mrf.mxu0
    %791 = vdwg.mxu0
    %v793 = vsel %vm251, %v708, 0
    %795 = vmatpush.bf16.msra.mxu0 0
    %796 = vmatpush.bf16.msra.mxu0 0
    %797 = vmatpush.bf16.msra.mxu0 0
    %798 = vmatpush.bf16.msra.mxu0 0
    %799 = vmatpush.bf16.msra.mxu0 0
    %800 = vmatpush.bf16.msra.mxu0 0
    %801 = vmatpush.bf16.msra.mxu0 0
    %802 = vmatpush.bf16.msra.mxu0 %v720
    %803 = vmatmul.bf16.gmra.mxu0 %v793
    %v804 = vpop.f32.mrf.mxu0
    %v805 = vadd.f32 0.0, %v804
    %v806 = vpop.f32.mrf.mxu0
    %807 = vdwg.mxu0
    %v809 = vsel %vm251, %v709, 0
    %811 = vmatpush.bf16.msra.mxu0 0
    %812 = vmatpush.bf16.msra.mxu0 0
    %813 = vmatpush.bf16.msra.mxu0 0
    %814 = vmatpush.bf16.msra.mxu0 0
    %815 = vmatpush.bf16.msra.mxu0 0
    %816 = vmatpush.bf16.msra.mxu0 0
    %817 = vmatpush.bf16.msra.mxu0 0
    %818 = vmatpush.bf16.msra.mxu0 %v739
    %819 = vmatmul.bf16.gmra.mxu0 %v809
    %v820 = vpop.f32.mrf.mxu0
    %v821 = vadd.f32 0.0, %v820
    %v822 = vpop.f32.mrf.mxu0
    %823 = vdwg.mxu0
    %v825 = vsel %vm251, %v710, 0
    %827 = vmatpush.bf16.msra.mxu0 0
    %828 = vmatpush.bf16.msra.mxu0 0
    %829 = vmatpush.bf16.msra.mxu0 0
    %830 = vmatpush.bf16.msra.mxu0 0
    %831 = vmatpush.bf16.msra.mxu0 0
    %832 = vmatpush.bf16.msra.mxu0 0
    %833 = vmatpush.bf16.msra.mxu0 0
    %834 = vmatpush.bf16.msra.mxu0 %v758
    %835 = vmatmul.bf16.gmra.mxu0 %v825
    %v836 = vpop.f32.mrf.mxu0
    %v837 = vadd.f32 0.0, %v836
    %v838 = vpop.f32.mrf.mxu0
    %839 = vdwg.mxu0
    %v841 = vsel %vm251, %v711, 0
    %843 = vmatpush.bf16.msra.mxu0 0
    %844 = vmatpush.bf16.msra.mxu0 0
    %845 = vmatpush.bf16.msra.mxu0 0
    %846 = vmatpush.bf16.msra.mxu0 0
    %847 = vmatpush.bf16.msra.mxu0 0
    %848 = vmatpush.bf16.msra.mxu0 0
    %849 = vmatpush.bf16.msra.mxu0 0
    %850 = vmatpush.bf16.msra.mxu0 %v777
    %851 = vmatmul.bf16.gmra.mxu0 %v841
    %v852 = vpop.f32.mrf.mxu0
    %v853 = vadd.f32 0.0, %v852
    %v854 = vpop.f32.mrf.mxu0
    %855 = vdwg.mxu0
    %v856 = vsel %vm71, %v732, 0.0
    %v857 = vsel %vm71, %v751, 0.0
    %v858 = vadd.f32 %v856, %v857
    %v859 = vsel %vm71, %v770, 0.0
    %v860 = vadd.f32 %v858, %v859
    %v861 = vsel %vm71, %v789, 0.0
    %v862 = vadd.f32 %v860, %v861
    %v863 = vsel %vm71, %v805, 0.0
    %v864 = vsel %vm71, %v821, 0.0
    %v865 = vadd.f32 %v863, %v864
    %v866 = vsel %vm71, %v837, 0.0
    %v867 = vadd.f32 %v865, %v866
    %v868 = vsel %vm71, %v853, 0.0
    %v869 = vadd.f32 %v867, %v868
    %v870 = vld [vmem:[%s4] sm:$0x1]
    %v872 = vperm.slane %v870, 0
    %v874 = vadd.f32 %v862, %v872
    %v875 = vadd.f32 %v869, %v872
    %876 = vst.msk [vmem:[#allocation2] sm:$0xff] %vm71, %v874
    %877 = vst.msk [vmem:[#allocation2 + $0x8] sm:$0xff] %vm71, %v875
    // Predicated region
    $region26: #{tpu_custom_call.1} parent=1 // pred_check
      _
    $region27: #{tpu_custom_call.1} parent=1 // pred_check_branch
      %879 = sbr.rel (0) target = $region29
    $region28: #{tpu_custom_call.1} parent=1 // pred_region
      %881 = vsyncadd [#allocation3], 0
      %s882 = sshll.u32 [#allocation2], 4
      %s883 = int_to_ptr.vmem [resolvable:$true] %s882
      %s884 = sshll.u32 %s6, 4
      %s885 = int_to_ptr.hbm [resolvable:$true] %s884
      %890 = dma.vmem_to_hbm [thread:$0]  %s883, 256, %s885, [#allocation3], 128, 128, 8
    $region29: #{tpu_custom_call.1} parent=1 // pred_fallthru
      _
    // Predicated region
    $region30: #{tpu_custom_call.1} parent=1 // pred_check
      _
    $region31: #{tpu_custom_call.1} parent=1 // pred_check_branch
      %892 = sbr.rel (0) target = $region33
    $region32: #{tpu_custom_call.1} parent=1 // pred_region
      %894 = dma.done [#allocation3], 256
    $region33: #{tpu_custom_call.1} parent=1 // pred_fallthru
      _
    %895 = vsyncpa [#allocation3], 1

</llo_original>
